<compile_context>
chip_gen: v5e
topology: v5e:2x2
jax: 0.10.0
libtpu: 0.0.40
codegen_flags: <defaults>
</compile_context>

<pallas_src>
import functools

import jax
import jax.numpy as jnp
from jax.experimental import pallas as pl
from jax.experimental.pallas import tpu as pltpu

KH = 3      # kernel_size (module default)
KW = 3
DIL = 2     # dilation   (module default)
PAD = 1     # padding    (module default)


def _round_up(x, m):
    return ((x + m - 1) // m) * m


def _pick_vmem_limit():
    """Generation-aware scoped-VMEM limit (v7x: 64 MiB phys -> ~48 MiB)."""
    try:
        cap = getattr(pltpu.get_tpu_info(), "vmem_capacity_bytes", None)
        if cap:
            return int(min(cap - 16 * 1024 * 1024, 96 * 1024 * 1024))
    except Exception:
        pass
    return 32 * 1024 * 1024


def _atrous_conv_bn_relu_kernel(cur_ref, nxt_ref, w_ref, shift_ref, o_ref,
                                cat_ref, *, shifts, tile):
    """One (image n, lane-tile r) grid step.

    cur_ref:   (Cin, T)        lane tile r of the flattened padded image
    nxt_ref:   (Cin, T)        lane tile r+1 (halo source for the tap shifts)
    w_ref:     (KH*KW, Cout_pad, Cin)  conv weight, BN scale folded in
    shift_ref: (Cout_pad, 1)   folded BN shift (f32)
    o_ref:     (Cout_pad, T)   lane-dense NCHW-flat output tile
    cat_ref:   (Cin, 2*T)      VMEM scratch: tile + halo
    """
    # Assemble current tile + halo with two aligned stores.
    cat_ref[:, :tile] = cur_ref[...]
    cat_ref[:, tile:] = nxt_ref[...]

    cout_pad = o_ref.shape[0]
    acc = jnp.zeros((cout_pad, tile), jnp.float32)
    # 9 statically-unrolled dilated taps: each is a static lane-offset slice of
    # the scratch feeding a (Cout_pad, Cin) @ (Cin, T) MXU matmul (f32 acc).
    for tap, s in enumerate(shifts):
        slab = cat_ref[:, s:s + tile]
        acc = acc + jnp.dot(w_ref[tap], slab,
                            preferred_element_type=jnp.float32)

    # BN scale is folded into w; epilogue is shift + ReLU, then dense stores.
    y = acc + shift_ref[...]
    o_ref[...] = jnp.maximum(y, 0.0).astype(o_ref.dtype)


def atrous_conv(x_nchw, w_oihw, gamma, beta, running_mean, running_var, *,
                eps=1e-5, compute_dtype=jnp.bfloat16, out_dtype=None):
    """Forward pass of AtrousConv.  Input/weights follow PyTorch conventions."""
    N, Cin, H, W = x_nchw.shape
    Cout = w_oihw.shape[0]
    assert w_oihw.shape == (Cout, Cin, KH, KW)
    out_dtype = out_dtype or x_nchw.dtype

    Ho = H + 2 * PAD - DIL * (KH - 1)
    Wo = W + 2 * PAD - DIL * (KW - 1)
    Hp = H + 2 * PAD
    Wp = W + 2 * PAD
    assert Ho > 0 and Wo > 0

    # Tap shifts in padded-flat coordinates (q = i*Wp + j).
    shifts = tuple(kh * DIL * Wp + kw * DIL
                   for kh in range(KH) for kw in range(KW))
    s_max = shifts[-1]                      # = 2*DIL*(Wp + 1)

    # Lane tile: must cover the tap halo; target >=512 lanes on real shapes,
    # shrunk (to a multiple of 128) when the whole image is smaller than that.
    F_out = Ho * Wp                         # padded-flat coords holding valid q
    tile = max(_round_up(s_max, 128), min(512, _round_up(F_out, 128)))
    F_out_pad = _round_up(F_out, tile)
    n_tiles = F_out_pad // tile
    # Input flat length: multiple of `tile`, >= one extra tile for the halo.
    F_in_pad = max(_round_up(Hp * Wp, tile), (n_tiles + 1) * tile)

    # Pad Cout to a sublane multiple so output stores are never masked.
    Cout_pad = _round_up(Cout, 8)

    # ------------- glue (single pad/reshape/cast; no im2col) -----------------
    xp = jnp.pad(x_nchw, ((0, 0), (0, 0), (PAD, PAD), (PAD, PAD)))
    x_flat = xp.reshape(N, Cin, Hp * Wp)
    x_flat = jnp.pad(x_flat, ((0, 0), (0, 0), (0, F_in_pad - Hp * Wp)))
    x_flat = x_flat.astype(compute_dtype)

    # Fold BatchNorm (eval mode): scale goes into the weights, shift stays.
    scale = gamma / jnp.sqrt(running_var + eps)
    shift = beta - running_mean * scale
    w_folded = (w_oihw.astype(jnp.float32) * scale[:, None, None, None])
    # (Cout, Cin, KH, KW) -> (KH*KW, Cout_pad, Cin); tap index = kh*KW + kw.
    w_taps = jnp.transpose(w_folded, (2, 3, 0, 1)).reshape(KH * KW, Cout, Cin)
    w_taps = jnp.pad(w_taps, ((0, 0), (0, Cout_pad - Cout), (0, 0)))
    w_taps = w_taps.astype(compute_dtype)
    shift_col = jnp.pad(shift, (0, Cout_pad - Cout)).reshape(Cout_pad, 1)
    shift_col = shift_col.astype(jnp.float32)

    # ------------- Pallas call ------------------------------------------------
    itemsize_in = jnp.dtype(compute_dtype).itemsize
    cost = pl.CostEstimate(
        flops=2 * N * Cout * Cin * KH * KW * Ho * Wo,
        transcendentals=0,
        bytes_accessed=(2 * N * Cin * F_in_pad * itemsize_in
                        + KH * KW * Cout_pad * Cin * itemsize_in
                        + N * Cout_pad * F_out_pad * jnp.dtype(out_dtype).itemsize))

    kernel = functools.partial(_atrous_conv_bn_relu_kernel,
                               shifts=shifts, tile=tile)

    out_flat = pl.pallas_call(
        kernel,
        out_shape=jax.ShapeDtypeStruct((N, Cout_pad, F_out_pad), out_dtype),
        grid=(N, n_tiles),
        in_specs=[
            # lane tile r of image n (auto-pipelined, double-buffered)
            pl.BlockSpec((pl.Squeezed(), Cin, tile), lambda n, r: (n, 0, r)),
            # lane tile r+1: halo for the dilated taps (array padded so it exists)
            pl.BlockSpec((pl.Squeezed(), Cin, tile), lambda n, r: (n, 0, r + 1)),
            # resident, BN-folded weight and shift (constant index_map)
            pl.BlockSpec((KH * KW, Cout_pad, Cin), lambda n, r: (0, 0, 0)),
            pl.BlockSpec((Cout_pad, 1), lambda n, r: (0, 0)),
        ],
        out_specs=pl.BlockSpec((pl.Squeezed(), Cout_pad, tile),
                               lambda n, r: (n, 0, r)),
        scratch_shapes=[pltpu.VMEM((Cin, 2 * tile), compute_dtype)],
        compiler_params=pltpu.CompilerParams(
            dimension_semantics=("parallel", "parallel"),
            vmem_limit_bytes=_pick_vmem_limit(),
        ),
        cost_estimate=cost,
    )(x_flat, x_flat, w_taps, shift_col)

    # Compact padded-flat coordinates back to NCHW (drops pad rows/cols).
    out = out_flat[:, :Cout, :Ho * Wp].reshape(N, Cout, Ho, Wp)[:, :, :, :Wo]
    return out


def _reference(x_nchw, w_oihw, gamma, beta, running_mean, running_var, eps=1e-5):
    """Pure-JAX reference matching PyTorch semantics (eval-mode BN)."""
    y = jax.lax.conv_general_dilated(
        x_nchw, w_oihw, window_strides=(1, 1),
        padding=[(PAD, PAD), (PAD, PAD)], rhs_dilation=(DIL, DIL),
        dimension_numbers=("NCHW", "OIHW", "NCHW"))
    scale = gamma / jnp.sqrt(running_var + eps)
    shift = beta - running_mean * scale
    y = y * scale[None, :, None, None] + shift[None, :, None, None]
    return jnp.maximum(y, 0.0)


if __name__ == "__main__":
    key = jax.random.PRNGKey(0)
    k_x, k_w, k_g, k_b, k_m, k_v = jax.random.split(key, 6)

    N, Cin, H, W = 2, 4, 16, 16
    Cout = 8

    x = jax.random.normal(k_x, (N, Cin, H, W), jnp.float32)
    # Conv2d weight (out_ch, in_ch, kH, kW), bias=False.
    w = jax.random.normal(k_w, (Cout, Cin, KH, KW), jnp.float32) * 0.1
    # BatchNorm2d parameters / running stats (deterministic init).
    gamma = 1.0 + 0.1 * jax.random.normal(k_g, (Cout,), jnp.float32)
    beta = 0.1 * jax.random.normal(k_b, (Cout,), jnp.float32)
    running_mean = 0.1 * jax.random.normal(k_m, (Cout,), jnp.float32)
    running_var = 1.0 + 0.1 * jax.random.uniform(k_v, (Cout,), jnp.float32)

    ref = _reference(x, w, gamma, beta, running_mean, running_var)

    # Default path: bf16 MXU inputs, f32 accumulation + epilogue.
    out = atrous_conv(x, w, gamma, beta, running_mean, running_var)
    out = jax.block_until_ready(out)
    assert out.shape == ref.shape == (N, Cout, H - 2, W - 2), out.shape
    assert jnp.allclose(out, ref, rtol=2e-2, atol=2e-2), \
        float(jnp.max(jnp.abs(out - ref)))

    # f32 path (tighter check of the padded-flat indexing / BN fold).
    out_f32 = atrous_conv(x, w, gamma, beta, running_mean, running_var,
                          compute_dtype=jnp.float32)
    out_f32 = jax.block_until_ready(out_f32)
    assert jnp.allclose(out_f32, ref, rtol=5e-3, atol=5e-3), \
        float(jnp.max(jnp.abs(out_f32 - ref)))

    print("KERNEL_OK")
</pallas_src>

<mosaic_0001>
module attributes {stable_mosaic.version = 11 : i64} {
  func.func @_atrous_conv_bn_relu_kernel(%arg0: i32, %arg1: i32, %arg2: memref<1x4x256xbf16, #tpu.memory_space<vmem>>, %arg3: memref<1x4x256xbf16, #tpu.memory_space<vmem>>, %arg4: memref<9x8x4xbf16, #tpu.memory_space<vmem>>, %arg5: memref<8x1xf32, #tpu.memory_space<vmem>>, %arg6: memref<1x8x256xf32, #tpu.memory_space<vmem>>, %arg7: memref<4x512xbf16, #tpu.memory_space<vmem>>) attributes {dimension_semantics = [#tpu.dimension_semantics<parallel>, #tpu.dimension_semantics<parallel>], iteration_bounds = array<i64: 2, 1>, scalar_prefetch = 0 : i64, scratch_operands = 1 : i64, tpu.core_type = #tpu.core_type<tc>, window_params = [{transform_indices = @transform_0, window_bounds = array<i64: 1, 4, 256>}, {transform_indices = @transform_1, window_bounds = array<i64: 1, 4, 256>}, {pipeline_mode = #tpu.pipeline_mode<synchronous>, transform_indices = @transform_2, window_bounds = array<i64: 9, 8, 4>}, {pipeline_mode = #tpu.pipeline_mode<synchronous>, transform_indices = @transform_3, window_bounds = array<i64: 8, 1>}, {transform_indices = @transform_4, window_bounds = array<i64: 1, 8, 256>}]} {
    %c0 = arith.constant 0 : index
    %c0_0 = arith.constant 0 : index
    %c0_1 = arith.constant 0 : index
    %0 = vector.load %arg2[%c0, %c0_0, %c0_1] : memref<1x4x256xbf16, #tpu.memory_space<vmem>>, vector<1x4x256xbf16>
    %1 = vector.shape_cast %0 : vector<1x4x256xbf16> to vector<4x256xbf16>
    %c0_2 = arith.constant 0 : index
    %c0_3 = arith.constant 0 : index
    %2 = vector.load %arg7[%c0_2, %c0_3] : memref<4x512xbf16, #tpu.memory_space<vmem>>, vector<4x256xbf16>
    tpu.vector_store %arg7[%c0_2, %c0_3], %1 {strides = array<i32>} : memref<4x512xbf16, #tpu.memory_space<vmem>>, vector<4x256xbf16>,
    %c0_4 = arith.constant 0 : index
    %c0_5 = arith.constant 0 : index
    %c0_6 = arith.constant 0 : index
    %3 = vector.load %arg3[%c0_4, %c0_5, %c0_6] : memref<1x4x256xbf16, #tpu.memory_space<vmem>>, vector<1x4x256xbf16>
    %4 = vector.shape_cast %3 : vector<1x4x256xbf16> to vector<4x256xbf16>
    %c0_7 = arith.constant 0 : index
    %c256 = arith.constant 256 : index
    %5 = vector.load %arg7[%c0_7, %c256] : memref<4x512xbf16, #tpu.memory_space<vmem>>, vector<4x256xbf16>
    tpu.vector_store %arg7[%c0_7, %c256], %4 {strides = array<i32>} : memref<4x512xbf16, #tpu.memory_space<vmem>>, vector<4x256xbf16>,
    %cst = arith.constant 0.000000e+00 : f32
    %6 = vector.broadcast %cst : f32 to vector<8x256xf32>
    %c0_8 = arith.constant 0 : index
    %c0_9 = arith.constant 0 : index
    %7 = vector.load %arg7[%c0_8, %c0_9] : memref<4x512xbf16, #tpu.memory_space<vmem>>, vector<4x256xbf16>
    %c0_10 = arith.constant 0 : index
    %c0_11 = arith.constant 0 : index
    %c0_12 = arith.constant 0 : index
    %8 = vector.load %arg4[%c0_10, %c0_11, %c0_12] : memref<9x8x4xbf16, #tpu.memory_space<vmem>>, vector<1x8x4xbf16>
    %9 = vector.shape_cast %8 : vector<1x8x4xbf16> to vector<8x4xbf16>
    %cst_13 = arith.constant dense<0.000000e+00> : vector<8x256xf32>
    %10 = tpu.matmul %9, %7, %cst_13 {dimension_numbers = #tpu.dot_dimension_numbers<[1], [0], [0], [1], [0, 0, 1, 1], [], []>} : vector<8x4xbf16>, vector<4x256xbf16>, vector<8x256xf32> -> vector<8x256xf32>
    %11 = arith.addf %6, %10 : vector<8x256xf32>
    %c0_14 = arith.constant 0 : index
    %c2 = arith.constant 2 : index
    %12 = vector.load %arg7[%c0_14, %c2] : memref<4x512xbf16, #tpu.memory_space<vmem>>, vector<4x256xbf16>
    %c1 = arith.constant 1 : index
    %c0_15 = arith.constant 0 : index
    %c0_16 = arith.constant 0 : index
    %13 = vector.load %arg4[%c1, %c0_15, %c0_16] : memref<9x8x4xbf16, #tpu.memory_space<vmem>>, vector<1x8x4xbf16>
    %14 = vector.shape_cast %13 : vector<1x8x4xbf16> to vector<8x4xbf16>
    %cst_17 = arith.constant dense<0.000000e+00> : vector<8x256xf32>
    %15 = tpu.matmul %14, %12, %cst_17 {dimension_numbers = #tpu.dot_dimension_numbers<[1], [0], [0], [1], [0, 0, 1, 1], [], []>} : vector<8x4xbf16>, vector<4x256xbf16>, vector<8x256xf32> -> vector<8x256xf32>
    %16 = arith.addf %11, %15 : vector<8x256xf32>
    %c0_18 = arith.constant 0 : index
    %c4 = arith.constant 4 : index
    %17 = vector.load %arg7[%c0_18, %c4] : memref<4x512xbf16, #tpu.memory_space<vmem>>, vector<4x256xbf16>
    %c2_19 = arith.constant 2 : index
    %c0_20 = arith.constant 0 : index
    %c0_21 = arith.constant 0 : index
    %18 = vector.load %arg4[%c2_19, %c0_20, %c0_21] : memref<9x8x4xbf16, #tpu.memory_space<vmem>>, vector<1x8x4xbf16>
    %19 = vector.shape_cast %18 : vector<1x8x4xbf16> to vector<8x4xbf16>
    %cst_22 = arith.constant dense<0.000000e+00> : vector<8x256xf32>
    %20 = tpu.matmul %19, %17, %cst_22 {dimension_numbers = #tpu.dot_dimension_numbers<[1], [0], [0], [1], [0, 0, 1, 1], [], []>} : vector<8x4xbf16>, vector<4x256xbf16>, vector<8x256xf32> -> vector<8x256xf32>
    %21 = arith.addf %16, %20 : vector<8x256xf32>
    %c0_23 = arith.constant 0 : index
    %c36 = arith.constant 36 : index
    %22 = vector.load %arg7[%c0_23, %c36] : memref<4x512xbf16, #tpu.memory_space<vmem>>, vector<4x256xbf16>
    %c3 = arith.constant 3 : index
    %c0_24 = arith.constant 0 : index
    %c0_25 = arith.constant 0 : index
    %23 = vector.load %arg4[%c3, %c0_24, %c0_25] : memref<9x8x4xbf16, #tpu.memory_space<vmem>>, vector<1x8x4xbf16>
    %24 = vector.shape_cast %23 : vector<1x8x4xbf16> to vector<8x4xbf16>
    %cst_26 = arith.constant dense<0.000000e+00> : vector<8x256xf32>
    %25 = tpu.matmul %24, %22, %cst_26 {dimension_numbers = #tpu.dot_dimension_numbers<[1], [0], [0], [1], [0, 0, 1, 1], [], []>} : vector<8x4xbf16>, vector<4x256xbf16>, vector<8x256xf32> -> vector<8x256xf32>
    %26 = arith.addf %21, %25 : vector<8x256xf32>
    %c0_27 = arith.constant 0 : index
    %c38 = arith.constant 38 : index
    %27 = vector.load %arg7[%c0_27, %c38] : memref<4x512xbf16, #tpu.memory_space<vmem>>, vector<4x256xbf16>
    %c4_28 = arith.constant 4 : index
    %c0_29 = arith.constant 0 : index
    %c0_30 = arith.constant 0 : index
    %28 = vector.load %arg4[%c4_28, %c0_29, %c0_30] : memref<9x8x4xbf16, #tpu.memory_space<vmem>>, vector<1x8x4xbf16>
    %29 = vector.shape_cast %28 : vector<1x8x4xbf16> to vector<8x4xbf16>
    %cst_31 = arith.constant dense<0.000000e+00> : vector<8x256xf32>
    %30 = tpu.matmul %29, %27, %cst_31 {dimension_numbers = #tpu.dot_dimension_numbers<[1], [0], [0], [1], [0, 0, 1, 1], [], []>} : vector<8x4xbf16>, vector<4x256xbf16>, vector<8x256xf32> -> vector<8x256xf32>
    %31 = arith.addf %26, %30 : vector<8x256xf32>
    %c0_32 = arith.constant 0 : index
    %c40 = arith.constant 40 : index
    %32 = vector.load %arg7[%c0_32, %c40] : memref<4x512xbf16, #tpu.memory_space<vmem>>, vector<4x256xbf16>
    %c5 = arith.constant 5 : index
    %c0_33 = arith.constant 0 : index
    %c0_34 = arith.constant 0 : index
    %33 = vector.load %arg4[%c5, %c0_33, %c0_34] : memref<9x8x4xbf16, #tpu.memory_space<vmem>>, vector<1x8x4xbf16>
    %34 = vector.shape_cast %33 : vector<1x8x4xbf16> to vector<8x4xbf16>
    %cst_35 = arith.constant dense<0.000000e+00> : vector<8x256xf32>
    %35 = tpu.matmul %34, %32, %cst_35 {dimension_numbers = #tpu.dot_dimension_numbers<[1], [0], [0], [1], [0, 0, 1, 1], [], []>} : vector<8x4xbf16>, vector<4x256xbf16>, vector<8x256xf32> -> vector<8x256xf32>
    %36 = arith.addf %31, %35 : vector<8x256xf32>
    %c0_36 = arith.constant 0 : index
    %c72 = arith.constant 72 : index
    %37 = vector.load %arg7[%c0_36, %c72] : memref<4x512xbf16, #tpu.memory_space<vmem>>, vector<4x256xbf16>
    %c6 = arith.constant 6 : index
    %c0_37 = arith.constant 0 : index
    %c0_38 = arith.constant 0 : index
    %38 = vector.load %arg4[%c6, %c0_37, %c0_38] : memref<9x8x4xbf16, #tpu.memory_space<vmem>>, vector<1x8x4xbf16>
    %39 = vector.shape_cast %38 : vector<1x8x4xbf16> to vector<8x4xbf16>
    %cst_39 = arith.constant dense<0.000000e+00> : vector<8x256xf32>
    %40 = tpu.matmul %39, %37, %cst_39 {dimension_numbers = #tpu.dot_dimension_numbers<[1], [0], [0], [1], [0, 0, 1, 1], [], []>} : vector<8x4xbf16>, vector<4x256xbf16>, vector<8x256xf32> -> vector<8x256xf32>
    %41 = arith.addf %36, %40 : vector<8x256xf32>
    %c0_40 = arith.constant 0 : index
    %c74 = arith.constant 74 : index
    %42 = vector.load %arg7[%c0_40, %c74] : memref<4x512xbf16, #tpu.memory_space<vmem>>, vector<4x256xbf16>
    %c7 = arith.constant 7 : index
    %c0_41 = arith.constant 0 : index
    %c0_42 = arith.constant 0 : index
    %43 = vector.load %arg4[%c7, %c0_41, %c0_42] : memref<9x8x4xbf16, #tpu.memory_space<vmem>>, vector<1x8x4xbf16>
    %44 = vector.shape_cast %43 : vector<1x8x4xbf16> to vector<8x4xbf16>
    %cst_43 = arith.constant dense<0.000000e+00> : vector<8x256xf32>
    %45 = tpu.matmul %44, %42, %cst_43 {dimension_numbers = #tpu.dot_dimension_numbers<[1], [0], [0], [1], [0, 0, 1, 1], [], []>} : vector<8x4xbf16>, vector<4x256xbf16>, vector<8x256xf32> -> vector<8x256xf32>
    %46 = arith.addf %41, %45 : vector<8x256xf32>
    %c0_44 = arith.constant 0 : index
    %c76 = arith.constant 76 : index
    %47 = vector.load %arg7[%c0_44, %c76] : memref<4x512xbf16, #tpu.memory_space<vmem>>, vector<4x256xbf16>
    %c8 = arith.constant 8 : index
    %c0_45 = arith.constant 0 : index
    %c0_46 = arith.constant 0 : index
    %48 = vector.load %arg4[%c8, %c0_45, %c0_46] : memref<9x8x4xbf16, #tpu.memory_space<vmem>>, vector<1x8x4xbf16>
    %49 = vector.shape_cast %48 : vector<1x8x4xbf16> to vector<8x4xbf16>
    %cst_47 = arith.constant dense<0.000000e+00> : vector<8x256xf32>
    %50 = tpu.matmul %49, %47, %cst_47 {dimension_numbers = #tpu.dot_dimension_numbers<[1], [0], [0], [1], [0, 0, 1, 1], [], []>} : vector<8x4xbf16>, vector<4x256xbf16>, vector<8x256xf32> -> vector<8x256xf32>
    %51 = arith.addf %46, %50 : vector<8x256xf32>
    %c0_48 = arith.constant 0 : index
    %c0_49 = arith.constant 0 : index
    %52 = vector.load %arg5[%c0_48, %c0_49] : memref<8x1xf32, #tpu.memory_space<vmem>>, vector<8x1xf32>
    %53 = vector.broadcast %52 : vector<8x1xf32> to vector<8x256xf32>
    %54 = arith.addf %51, %53 : vector<8x256xf32>
    %cst_50 = arith.constant 0.000000e+00 : f32
    %55 = vector.broadcast %cst_50 : f32 to vector<8x256xf32>
    %56 = arith.maximumf %54, %55 : vector<8x256xf32>
    %c0_51 = arith.constant 0 : index
    %c0_52 = arith.constant 0 : index
    %c0_53 = arith.constant 0 : index
    %57 = vector.load %arg6[%c0_51, %c0_52, %c0_53] : memref<1x8x256xf32, #tpu.memory_space<vmem>>, vector<1x8x256xf32>
    %58 = vector.shape_cast %57 : vector<1x8x256xf32> to vector<8x256xf32>
    %59 = vector.shape_cast %56 : vector<8x256xf32> to vector<1x8x256xf32>
    tpu.vector_store %arg6[%c0_51, %c0_52, %c0_53], %59 {strides = array<i32>} : memref<1x8x256xf32, #tpu.memory_space<vmem>>, vector<1x8x256xf32>,
    return
  }
  func.func @transform_0(%arg0: i32, %arg1: i32) -> (i32, i32, i32) {
    %c0_i32 = arith.constant 0 : i32
    %c0_i32_0 = arith.constant 0 : i32
    return %arg0, %c0_i32, %arg1 : i32, i32, i32
  }
  func.func @transform_1(%arg0: i32, %arg1: i32) -> (i32, i32, i32) {
    %c1_i32 = arith.constant 1 : i32
    %0 = arith.addi %arg1, %c1_i32 : i32
    %c0_i32 = arith.constant 0 : i32
    %c0_i32_0 = arith.constant 0 : i32
    return %arg0, %c0_i32, %0 : i32, i32, i32
  }
  func.func @transform_2(%arg0: i32, %arg1: i32) -> (i32, i32, i32) {
    %c0_i32 = arith.constant 0 : i32
    %c0_i32_0 = arith.constant 0 : i32
    %c0_i32_1 = arith.constant 0 : i32
    %c0_i32_2 = arith.constant 0 : i32
    return %c0_i32, %c0_i32_0, %c0_i32_1 : i32, i32, i32
  }
  func.func @transform_3(%arg0: i32, %arg1: i32) -> (i32, i32) {
    %c0_i32 = arith.constant 0 : i32
    %c0_i32_0 = arith.constant 0 : i32
    %c0_i32_1 = arith.constant 0 : i32
    return %c0_i32, %c0_i32_0 : i32, i32
  }
  func.func @transform_4(%arg0: i32, %arg1: i32) -> (i32, i32, i32) {
    %c0_i32 = arith.constant 0 : i32
    %c0_i32_0 = arith.constant 0 : i32
    return %arg0, %c0_i32, %arg1 : i32, i32, i32
  }
}

</mosaic_0001>

<llo_original>
// kernel: tpu_custom_call.1
$region0: #{tpu_custom_call.1}
  #allocation0 [shape = 'u32[]', space=smem, size = 0x4, offset = 0x4, fixed_abs, tag = 'smem constant byte address 0x4 - core index']
  #allocation1 [shape = 'u32[72,128]{1,0:T(1,128)}', space=vmem, size = 0x9000, scoped, tag = 'internal scratch']
  #allocation2 [shape = 'bf16[4,512]{1,0:T(4,128)(2,1)}', space=vmem, size = 0x1000, scoped, tag = 'scratch operand']
  %s0 = inlined_call_operand.vmem [shape: bf16[2,4,512], index: 0, kind: input, shape index: {}]
  %s1 = inlined_call_operand.vmem [shape: bf16[2,4,512], index: 1, kind: input, shape index: {}]
  %s2 = inlined_call_operand.vmem [shape: bf16[9,8,4], index: 2, kind: input, shape index: {}]
  %s3 = inlined_call_operand.vmem [shape: f32[8,1], index: 3, kind: input, shape index: {}]
  %s4 = inlined_call_operand.hbm [shape: f32[2,8,256], index: 4, kind: output, shape index: {}]
  %s5 = sld [smem:[#allocation0]]
  $region49: #{tpu_custom_call.1} parent=0
    _
  %s7 = ssub.s32 1, %s5
  %s8 = scalar_select 0, %s7, %s5
  $region1: #{tpu_custom_call.1} parent=0
    #allocation3 [shape = 'u8[16384]{0}', space=vmem, size = 0x4000, scoped, tag = 'output window, operand 0']
    #allocation4 [shape = 's32[2]{0}', space=sflag, size = 0x8, scoped, tag = 'scoped memory for tpu_custom_call.1']
    %9 = vsyncpa [#allocation4], 0
    %s10 = scalar_lea.sflag [#allocation4], 1
    %11 = vsyncpa %s10, 0
    loop: start=0, step=1, limit=4
    $region2: #{tpu_custom_call.1} parent=1 // loop_pre_header
      _
    $region3: #{tpu_custom_call.1} parent=1 // loop_header
      %s13 = sphi 0, %s17
      %p14 = scmp.ge.s32.totalorder %s13, 4
      %s20 = sphi 0, %s32
      %s21 = sphi 0, %s28
      %s22 = sphi 0, %s20
      %s23 = sphi 0, %s21
      %s24 = sphi 0, %s22
      %s25 = sphi 0, %s23
      %s37 = sphi 0, %s39
      %s40 = sphi 0, %s37
      %s41 = sphi 0, %s40
      %s57 = sphi 0, %s41
      %s67 = sphi 0, %s69
      %s70 = sphi 0, %s67
      %s71 = sphi 0, %s70
      %s87 = sphi 0, %s71
      %s91 = sphi 0, %s91
      %s93 = sphi 0, %s91
      %s94 = sphi 0, %s93
      %s108 = sphi 0, %s94
      %s112 = sphi 0, %s112
      %s114 = sphi 0, %s112
      %s115 = sphi 0, %s114
      %s129 = sphi 0, %s115
      %s137 = sphi 0, %s139
      %s140 = sphi 0, %s137
      %s141 = sphi 0, %s140
      %s157 = sphi 0, %s141
    $region4: #{tpu_custom_call.1} parent=1 // loop_header_branch
      %16 = sbr.rel (%p14) target = $region8
    $region5: #{tpu_custom_call.1} parent=1 // loop_body
      %s18 = ssub.s32 %s13, 1
      %s19 = ssub.s32 %s13, 2
      %s26 = sadd.s32 1, %s21
      %p27 = scmp.ge.s32.totalorder %s26, 1
      %s28 = scalar_select %p27, 0, %s26
      %s29 = sadd.s32 1, %s20
      %s30 = scalar_select %p27, %s29, %s20
      %p31 = scmp.ge.s32.totalorder %s30, 2
      %s32 = scalar_select %p31, 0, %s30
      %s33 = ssub.s32 %s20, %s32
      %s34 = ssub.s32 %s21, %s28
      %s35 = sor.u32 %s33, %s34
      %p36 = scmp.eq.s32.totalorder %s35, 0
      %s38 = sadd.s32 %s37, 1
      %s39 = scalar_select %p36, %s37, %s38
      %p42 = pneg %p36
      %p43 = scmp.eq.s32.totalorder %s13, 1
      %p44 = por %p42, %p43
      %p45 = scmp.ne.s32.totalorder %s37, %s40
      %p46 = scmp.eq.s32.totalorder %s13, 0
      %p47 = por %p45, %p46
      %p48 = scmp.ne.s32.totalorder %s37, %s40
      %p49 = scmp.eq.s32.totalorder %s18, 1
      %p50 = por %p48, %p49
      %p51 = scmp.ne.s32.totalorder %s40, %s41
      %p52 = scmp.eq.s32.totalorder %s18, 0
      %p53 = por %p51, %p52
      %p54 = scmp.ne.s32.totalorder %s40, %s41
      %p55 = scmp.eq.s32.totalorder %s19, 1
      %p56 = por %p54, %p55
      %p58 = scmp.ne.s32.totalorder %s41, %s57
      %p59 = scmp.eq.s32.totalorder %s19, 0
      %p60 = por %p58, %p59
      %s61 = sadd.s32 %s21, 1
      %s62 = sadd.s32 %s28, 1
      %s63 = ssub.s32 %s20, %s32
      %s64 = ssub.s32 %s61, %s62
      %s65 = sor.u32 %s63, %s64
      %p66 = scmp.eq.s32.totalorder %s65, 0
      %s68 = sadd.s32 %s67, 1
      %s69 = scalar_select %p66, %s67, %s68
      %p72 = pneg %p66
      %p73 = scmp.eq.s32.totalorder %s13, 1
      %p74 = por %p72, %p73
      %p75 = scmp.ne.s32.totalorder %s67, %s70
      %p76 = scmp.eq.s32.totalorder %s13, 0
      %p77 = por %p75, %p76
      %p78 = scmp.ne.s32.totalorder %s67, %s70
      %p79 = scmp.eq.s32.totalorder %s18, 1
      %p80 = por %p78, %p79
      %p81 = scmp.ne.s32.totalorder %s70, %s71
      %p82 = scmp.eq.s32.totalorder %s18, 0
      %p83 = por %p81, %p82
      %p84 = scmp.ne.s32.totalorder %s70, %s71
      %p85 = scmp.eq.s32.totalorder %s19, 1
      %p86 = por %p84, %p85
      %p88 = scmp.ne.s32.totalorder %s71, %s87
      %p89 = scmp.eq.s32.totalorder %s19, 0
      %p90 = por %p88, %p89
      %s92 = sadd.s32 %s91, 1
      %p95 = scmp.eq.s32.totalorder %s13, 1
      %p96 = scmp.ne.s32.totalorder %s91, %s93
      %p97 = scmp.eq.s32.totalorder %s13, 0
      %p98 = por %p96, %p97
      %p99 = scmp.ne.s32.totalorder %s91, %s93
      %p100 = scmp.eq.s32.totalorder %s18, 1
      %p101 = por %p99, %p100
      %p102 = scmp.ne.s32.totalorder %s93, %s94
      %p103 = scmp.eq.s32.totalorder %s18, 0
      %p104 = por %p102, %p103
      %p105 = scmp.ne.s32.totalorder %s93, %s94
      %p106 = scmp.eq.s32.totalorder %s19, 1
      %p107 = por %p105, %p106
      %p109 = scmp.ne.s32.totalorder %s94, %s108
      %p110 = scmp.eq.s32.totalorder %s19, 0
      %p111 = por %p109, %p110
      %s113 = sadd.s32 %s112, 1
      %p116 = scmp.eq.s32.totalorder %s13, 1
      %p117 = scmp.ne.s32.totalorder %s112, %s114
      %p118 = scmp.eq.s32.totalorder %s13, 0
      %p119 = por %p117, %p118
      %p120 = scmp.ne.s32.totalorder %s112, %s114
      %p121 = scmp.eq.s32.totalorder %s18, 1
      %p122 = por %p120, %p121
      %p123 = scmp.ne.s32.totalorder %s114, %s115
      %p124 = scmp.eq.s32.totalorder %s18, 0
      %p125 = por %p123, %p124
      %p126 = scmp.ne.s32.totalorder %s114, %s115
      %p127 = scmp.eq.s32.totalorder %s19, 1
      %p128 = por %p126, %p127
      %p130 = scmp.ne.s32.totalorder %s115, %s129
      %p131 = scmp.eq.s32.totalorder %s19, 0
      %p132 = por %p130, %p131
      %s133 = ssub.s32 %s20, %s32
      %s134 = ssub.s32 %s21, %s28
      %s135 = sor.u32 %s133, %s134
      %p136 = scmp.eq.s32.totalorder %s135, 0
      %s138 = sadd.s32 %s137, 1
      %s139 = scalar_select %p136, %s137, %s138
      %p142 = pneg %p136
      %p143 = scmp.eq.s32.totalorder %s13, 1
      %p144 = por %p142, %p143
      %p145 = scmp.ne.s32.totalorder %s137, %s140
      %p146 = scmp.eq.s32.totalorder %s13, 0
      %p147 = por %p145, %p146
      %p148 = scmp.ne.s32.totalorder %s137, %s140
      %p149 = scmp.eq.s32.totalorder %s18, 1
      %p150 = por %p148, %p149
      %p151 = scmp.ne.s32.totalorder %s140, %s141
      %p152 = scmp.eq.s32.totalorder %s18, 0
      %p153 = por %p151, %p152
      %p154 = scmp.ne.s32.totalorder %s140, %s141
      %p155 = scmp.eq.s32.totalorder %s19, 1
      %p156 = por %p154, %p155
      %p158 = scmp.ne.s32.totalorder %s141, %s157
      %p159 = scmp.eq.s32.totalorder %s19, 0
      %p160 = por %p158, %p159
      %p161 = scmp.le.s32.totalorder 1, %s13
      %p162 = scmp.lt.s32.totalorder %s13, 3
      %p163 = pnand %p161, %p162
      %p164 = pneg %p163
      // Predicated region
      $region9: #{tpu_custom_call.1} parent=5 // pred_check
        _
      $region10: #{tpu_custom_call.1} parent=5 // pred_check_branch
        %166 = sbr.rel (%p163) target = $region12
      $region11: #{tpu_custom_call.1} parent=5 // pred_region
        %s167 = ssub.s32 %s13, 1
        // Predicated region
        $region13: #{tpu_custom_call.1} parent=11 // pred_check
          %p168 = pneg %p104
        $region14: #{tpu_custom_call.1} parent=11 // pred_check_branch
          %170 = sbr.rel (%p168) target = $region16
        $region15: #{tpu_custom_call.1} parent=11 // pred_region
          _
        $region16: #{tpu_custom_call.1} parent=11 // pred_fallthru
          _
        // Predicated region
        $region17: #{tpu_custom_call.1} parent=11 // pred_check
          %p171 = pneg %p125
        $region18: #{tpu_custom_call.1} parent=11 // pred_check_branch
          %173 = sbr.rel (%p171) target = $region20
        $region19: #{tpu_custom_call.1} parent=11 // pred_region
          _
        $region20: #{tpu_custom_call.1} parent=11 // pred_fallthru
          _
      $region12: #{tpu_custom_call.1} parent=5 // pred_fallthru
        _
      %p174 = scmp.lt.s32.totalorder %s13, 2
      // Predicated region
      $region21: #{tpu_custom_call.1} parent=5 // pred_check
        %p175 = pneg %p174
      $region22: #{tpu_custom_call.1} parent=5 // pred_check_branch
        %177 = sbr.rel (%p175) target = $region24
      $region23: #{tpu_custom_call.1} parent=5 // pred_region
        // Predicated region
        $region25: #{tpu_custom_call.1} parent=23 // pred_check
          %p178 = pneg %p47
        $region26: #{tpu_custom_call.1} parent=23 // pred_check_branch
          %180 = sbr.rel (%p178) target = $region28
        $region27: #{tpu_custom_call.1} parent=23 // pred_region
          %s181 = smul.u32 2, %s21
          %p182 = scmp.lt.s32.totalorder %s20, 1
          %s183 = scalar_select %p182, %s20, 1
          %p184 = scmp.lt.s32.totalorder %s181, 3
          %s185 = scalar_select %p184, %s181, 3
          %s186 = smul.addr %s183, 4
          %s187 = sadd.s32 %s185, %s186
          %s188 = smul.addr %s187, 2
          %s189 = scalar_lea.vmem %s0, %s188
          %s190 = smul.u32 2, %s21
        $region28: #{tpu_custom_call.1} parent=23 // pred_fallthru
          _
        // Predicated region
        $region29: #{tpu_custom_call.1} parent=23 // pred_check
          %p191 = pneg %p77
        $region30: #{tpu_custom_call.1} parent=23 // pred_check_branch
          %193 = sbr.rel (%p191) target = $region32
        $region31: #{tpu_custom_call.1} parent=23 // pred_region
          %s194 = sadd.s32 %s21, 1
          %s195 = smul.u32 2, %s194
          %p196 = scmp.lt.s32.totalorder %s20, 1
          %s197 = scalar_select %p196, %s20, 1
          %p198 = scmp.lt.s32.totalorder %s195, 3
          %s199 = scalar_select %p198, %s195, 3
          %s200 = smul.addr %s197, 4
          %s201 = sadd.s32 %s199, %s200
          %s202 = smul.addr %s201, 2
          %s203 = scalar_lea.vmem %s1, %s202
          %s204 = sadd.s32 %s21, 1
          %s205 = smul.u32 2, %s204
        $region32: #{tpu_custom_call.1} parent=23 // pred_fallthru
          _
      $region24: #{tpu_custom_call.1} parent=5 // pred_fallthru
        _
      %p206 = scmp.le.s32.totalorder 1, %s13
      %p207 = scmp.lt.s32.totalorder %s13, 3
      %p208 = pnand %p206, %p207
      %p209 = pneg %p208
      // Predicated region
      $region33: #{tpu_custom_call.1} parent=5 // pred_check
        _
      $region34: #{tpu_custom_call.1} parent=5 // pred_check_branch
        %211 = sbr.rel (%p208) target = $region36
      $region35: #{tpu_custom_call.1} parent=5 // pred_region
        %s212 = ssub.s32 %s13, 1
        %s213 = smul.u32 2, %s23
        %p214 = scmp.lt.s32.totalorder %s22, 1
        %s215 = scalar_select %p214, %s22, 1
        %p216 = scmp.lt.s32.totalorder %s213, 3
        %s217 = scalar_select %p216, %s213, 3
        %s218 = smul.addr %s215, 4
        %s219 = sadd.s32 %s217, %s218
        %s220 = smul.addr %s219, 2
        %s221 = scalar_lea.vmem %s0, %s220
        %p222 = pneg %p53
        %p223 = pneg %p50
        %s224 = sadd.s32 %s23, 1
        %s225 = smul.u32 2, %s224
        %p226 = scmp.lt.s32.totalorder %s22, 1
        %s227 = scalar_select %p226, %s22, 1
        %p228 = scmp.lt.s32.totalorder %s225, 3
        %s229 = scalar_select %p228, %s225, 3
        %s230 = smul.addr %s227, 4
        %s231 = sadd.s32 %s229, %s230
        %s232 = smul.addr %s231, 2
        %s233 = scalar_lea.vmem %s1, %s232
        %p234 = pneg %p83
        %p235 = pneg %p80
        %p236 = pneg %p104
        %p237 = pneg %p101
        %p238 = pneg %p125
        %p239 = pneg %p122
        %p240 = pneg %p153
        %p241 = pneg %p150
        %s242 = sand.u32 %s140, 1
        %s243 = scalar_lea.sflag [#allocation4], %s242
        %s244 = sand.u32 %s140, 1
        %s245 = smul.addr %s244, 16
        %s246 = scalar_lea.vmem [#allocation3], %s245
        %s247 = smul.u32 2, %s23
        %p248 = scmp.lt.s32.totalorder %s22, 1
        %s249 = scalar_select %p248, %s22, 1
        %p250 = scmp.lt.s32.totalorder %s247, 3
        %s251 = scalar_select %p250, %s247, 3
        %s252 = smul.addr %s249, 4
        %s253 = sadd.s32 %s251, %s252
        %s254 = smul.addr %s253, 2
        %s255 = scalar_lea.vmem %s0, %s254
        %s256 = smul.u32 2, %s23
        %s257 = sadd.s32 %s23, 1
        %s258 = smul.u32 2, %s257
        %p259 = scmp.lt.s32.totalorder %s22, 1
        %s260 = scalar_select %p259, %s22, 1
        %p261 = scmp.lt.s32.totalorder %s258, 3
        %s262 = scalar_select %p261, %s258, 3
        %s263 = smul.addr %s260, 4
        %s264 = sadd.s32 %s262, %s263
        %s265 = smul.addr %s264, 2
        %s266 = scalar_lea.vmem %s1, %s265
        %s267 = sadd.s32 %s23, 1
        %s268 = smul.u32 2, %s267
        %s269 = smul.u32 2, %s23
        %v271 = vld [vmem:[%s255] sm:$0xf]
        %272 = vst [vmem:[#allocation2] sm:$0xf] %v271
        %v273 = vld [vmem:[%s266] sm:$0xf]
        %274 = vst [vmem:[#allocation2 + $0x4] sm:$0xf] %v273
        %v275 = vld [vmem:[#allocation2] sm:$0xf]
        %v276 = vld [vmem:[%s2] sm:$0xf]
        %v277 = vld [vmem:[#allocation2] sm:$0x3f]
        %s278 = scalar_lea.vmem %s2, 4
        %v279 = vld [vmem:[%s278] sm:$0xf]
        %281 = vst [vmem:[#allocation1] ss:$4 sm:$0xff] %v277
        %v282 = vld.sshfl [vmem:[#allocation1] sm:$0xff pattern:$0x73625140]
        %v284 = vld.sshfl [vmem:[#allocation1 + $0x8] sm:$0xff pattern:$0x73625140]
        %v286 = vld.sshfl [vmem:[#allocation1 + $0x10] sm:$0xff pattern:$0x73625140]
        %288 = vrot.lane.b32.xlu0 %v282, 126
        %v289 = vpop.permute.xlu0 %288
        %290 = vrot.lane.b32.xlu0 %v284, 126
        %v291 = vpop.permute.xlu0 %290
        %292 = vrot.lane.b32.xlu0 %v286, 126
        %v293 = vpop.permute.xlu0 %292
        %vm294 = vcmask 1031168
        %v295 = vsel %vm294, %v289, %v291
        %v296 = vsel %vm294, %v291, %v293
        %vm297 = vcmask 31744
        %v299 = vsel %vm297, %v279, 0
        %vm301 = vcmask 1041408
        %v303 = vsel %vm301, %v295, 0
        %v306 = vsel %vm301, %v296, 0
        %308 = vmatpush.bf16.msra.mxu0 0
        %309 = vmatpush.bf16.msra.mxu0 0
        %310 = vmatpush.bf16.msra.mxu0 0
        %311 = vmatpush.bf16.msra.mxu0 0
        %312 = vmatpush.bf16.msra.mxu0 0
        %313 = vmatpush.bf16.msra.mxu0 0
        %314 = vmatpush.bf16.msra.mxu0 0
        %315 = vmatpush.bf16.msra.mxu0 %v303
        %316 = vmatmul.bf16.gmra.mxu0 %v299
        %v317 = vpop.f32.mrf.mxu0
        %v318 = vadd.f32 0.0, %v317
        %v319 = vpop.f32.mrf.mxu0
        %320 = vdwg.mxu0
        %321 = vmatpush.bf16.msra.mxu0 0
        %322 = vmatpush.bf16.msra.mxu0 0
        %323 = vmatpush.bf16.msra.mxu0 0
        %324 = vmatpush.bf16.msra.mxu0 0
        %325 = vmatpush.bf16.msra.mxu0 0
        %326 = vmatpush.bf16.msra.mxu0 0
        %327 = vmatpush.bf16.msra.mxu0 0
        %328 = vmatpush.bf16.msra.mxu0 %v306
        %329 = vmatmul.bf16.gmra.mxu0 %v299
        %v330 = vpop.f32.mrf.mxu0
        %v331 = vadd.f32 0.0, %v330
        %v332 = vpop.f32.mrf.mxu0
        %333 = vdwg.mxu0
        %335 = vst [vmem:[#allocation1] ss:$4 sm:$0xff] %v275
        %v336 = vld.sshfl [vmem:[#allocation1] sm:$0xff pattern:$0x73625140]
        %v337 = vld.sshfl [vmem:[#allocation1 + $0x8] sm:$0xff pattern:$0x73625140]
        %v339 = vsel %vm297, %v276, 0
        %v341 = vsel %vm301, %v336, 0
        %v343 = vsel %vm301, %v337, 0
        %345 = vmatpush.bf16.msra.mxu0 0
        %346 = vmatpush.bf16.msra.mxu0 0
        %347 = vmatpush.bf16.msra.mxu0 0
        %348 = vmatpush.bf16.msra.mxu0 0
        %349 = vmatpush.bf16.msra.mxu0 0
        %350 = vmatpush.bf16.msra.mxu0 0
        %351 = vmatpush.bf16.msra.mxu0 0
        %352 = vmatpush.bf16.msra.mxu0 %v341
        %353 = vmatmul.bf16.gmra.mxu0 %v339
        %v354 = vpop.f32.mrf.mxu0
        %v355 = vadd.f32 %v318, %v354
        %v356 = vpop.f32.mrf.mxu0
        %357 = vdwg.mxu0
        %358 = vmatpush.bf16.msra.mxu0 0
        %359 = vmatpush.bf16.msra.mxu0 0
        %360 = vmatpush.bf16.msra.mxu0 0
        %361 = vmatpush.bf16.msra.mxu0 0
        %362 = vmatpush.bf16.msra.mxu0 0
        %363 = vmatpush.bf16.msra.mxu0 0
        %364 = vmatpush.bf16.msra.mxu0 0
        %365 = vmatpush.bf16.msra.mxu0 %v343
        %366 = vmatmul.bf16.gmra.mxu0 %v339
        %v367 = vpop.f32.mrf.mxu0
        %v368 = vadd.f32 %v331, %v367
        %v369 = vpop.f32.mrf.mxu0
        %370 = vdwg.mxu0
        %v371 = vld [vmem:[#allocation2] sm:$0x3f]
        %s372 = scalar_lea.vmem %s2, 8
        %v373 = vld [vmem:[%s372] sm:$0xf]
        %375 = vst [vmem:[#allocation1] ss:$4 sm:$0xff] %v371
        %v376 = vld.sshfl [vmem:[#allocation1] sm:$0xff pattern:$0x73625140]
        %v378 = vld.sshfl [vmem:[#allocation1 + $0x8] sm:$0xff pattern:$0x73625140]
        %v380 = vld.sshfl [vmem:[#allocation1 + $0x10] sm:$0xff pattern:$0x73625140]
        %382 = vrot.lane.b32.xlu0 %v376, 124
        %v383 = vpop.permute.xlu0 %382
        %384 = vrot.lane.b32.xlu0 %v378, 124
        %v385 = vpop.permute.xlu0 %384
        %386 = vrot.lane.b32.xlu0 %v380, 124
        %v387 = vpop.permute.xlu0 %386
        %vm388 = vcmask 1014784
        %v389 = vsel %vm388, %v383, %v385
        %v390 = vsel %vm388, %v385, %v387
        %v392 = vsel %vm297, %v373, 0
        %v395 = vsel %vm301, %v389, 0
        %v398 = vsel %vm301, %v390, 0
        %400 = vmatpush.bf16.msra.mxu0 0
        %401 = vmatpush.bf16.msra.mxu0 0
        %402 = vmatpush.bf16.msra.mxu0 0
        %403 = vmatpush.bf16.msra.mxu0 0
        %404 = vmatpush.bf16.msra.mxu0 0
        %405 = vmatpush.bf16.msra.mxu0 0
        %406 = vmatpush.bf16.msra.mxu0 0
        %407 = vmatpush.bf16.msra.mxu0 %v395
        %408 = vmatmul.bf16.gmra.mxu0 %v392
        %v409 = vpop.f32.mrf.mxu0
        %v410 = vadd.f32 0.0, %v409
        %v411 = vpop.f32.mrf.mxu0
        %412 = vdwg.mxu0
        %413 = vmatpush.bf16.msra.mxu0 0
        %414 = vmatpush.bf16.msra.mxu0 0
        %415 = vmatpush.bf16.msra.mxu0 0
        %416 = vmatpush.bf16.msra.mxu0 0
        %417 = vmatpush.bf16.msra.mxu0 0
        %418 = vmatpush.bf16.msra.mxu0 0
        %419 = vmatpush.bf16.msra.mxu0 0
        %420 = vmatpush.bf16.msra.mxu0 %v398
        %421 = vmatmul.bf16.gmra.mxu0 %v392
        %v422 = vpop.f32.mrf.mxu0
        %v423 = vadd.f32 0.0, %v422
        %v424 = vpop.f32.mrf.mxu0
        %425 = vdwg.mxu0
        %v426 = vadd.f32 %v355, %v410
        %v427 = vadd.f32 %v368, %v423
        %v428 = vld [vmem:[#allocation2] sm:$0x3f]
        %s429 = scalar_lea.vmem %s2, 12
        %v430 = vld [vmem:[%s429] sm:$0xf]
        %432 = vst [vmem:[#allocation1] ss:$4 sm:$0xff] %v428
        %v433 = vld.sshfl [vmem:[#allocation1] sm:$0xff pattern:$0x73625140]
        %v435 = vld.sshfl [vmem:[#allocation1 + $0x8] sm:$0xff pattern:$0x73625140]
        %v437 = vld.sshfl [vmem:[#allocation1 + $0x10] sm:$0xff pattern:$0x73625140]
        %439 = vrot.lane.b32.xlu0 %v433, 92
        %v440 = vpop.permute.xlu0 %439
        %441 = vrot.lane.b32.xlu0 %v435, 92
        %v442 = vpop.permute.xlu0 %441
        %443 = vrot.lane.b32.xlu0 %v437, 92
        %v444 = vpop.permute.xlu0 %443
        %vm445 = vcmask 752640
        %v446 = vsel %vm445, %v440, %v442
        %v447 = vsel %vm445, %v442, %v444
        %v449 = vsel %vm297, %v430, 0
        %v452 = vsel %vm301, %v446, 0
        %v455 = vsel %vm301, %v447, 0
        %457 = vmatpush.bf16.msra.mxu0 0
        %458 = vmatpush.bf16.msra.mxu0 0
        %459 = vmatpush.bf16.msra.mxu0 0
        %460 = vmatpush.bf16.msra.mxu0 0
        %461 = vmatpush.bf16.msra.mxu0 0
        %462 = vmatpush.bf16.msra.mxu0 0
        %463 = vmatpush.bf16.msra.mxu0 0
        %464 = vmatpush.bf16.msra.mxu0 %v452
        %465 = vmatmul.bf16.gmra.mxu0 %v449
        %v466 = vpop.f32.mrf.mxu0
        %v467 = vadd.f32 0.0, %v466
        %v468 = vpop.f32.mrf.mxu0
        %469 = vdwg.mxu0
        %470 = vmatpush.bf16.msra.mxu0 0
        %471 = vmatpush.bf16.msra.mxu0 0
        %472 = vmatpush.bf16.msra.mxu0 0
        %473 = vmatpush.bf16.msra.mxu0 0
        %474 = vmatpush.bf16.msra.mxu0 0
        %475 = vmatpush.bf16.msra.mxu0 0
        %476 = vmatpush.bf16.msra.mxu0 0
        %477 = vmatpush.bf16.msra.mxu0 %v455
        %478 = vmatmul.bf16.gmra.mxu0 %v449
        %v479 = vpop.f32.mrf.mxu0
        %v480 = vadd.f32 0.0, %v479
        %v481 = vpop.f32.mrf.mxu0
        %482 = vdwg.mxu0
        %v483 = vadd.f32 %v426, %v467
        %v484 = vadd.f32 %v427, %v480
        %v485 = vld [vmem:[#allocation2] sm:$0x3f]
        %s486 = scalar_lea.vmem %s2, 16
        %v487 = vld [vmem:[%s486] sm:$0xf]
        %489 = vst [vmem:[#allocation1] ss:$4 sm:$0xff] %v485
        %v490 = vld.sshfl [vmem:[#allocation1] sm:$0xff pattern:$0x73625140]
        %v492 = vld.sshfl [vmem:[#allocation1 + $0x8] sm:$0xff pattern:$0x73625140]
        %v494 = vld.sshfl [vmem:[#allocation1 + $0x10] sm:$0xff pattern:$0x73625140]
        %496 = vrot.lane.b32.xlu0 %v490, 90
        %v497 = vpop.permute.xlu0 %496
        %498 = vrot.lane.b32.xlu0 %v492, 90
        %v499 = vpop.permute.xlu0 %498
        %500 = vrot.lane.b32.xlu0 %v494, 90
        %v501 = vpop.permute.xlu0 %500
        %vm502 = vcmask 736256
        %v503 = vsel %vm502, %v497, %v499
        %v504 = vsel %vm502, %v499, %v501
        %v506 = vsel %vm297, %v487, 0
        %v509 = vsel %vm301, %v503, 0
        %v512 = vsel %vm301, %v504, 0
        %514 = vmatpush.bf16.msra.mxu0 0
        %515 = vmatpush.bf16.msra.mxu0 0
        %516 = vmatpush.bf16.msra.mxu0 0
        %517 = vmatpush.bf16.msra.mxu0 0
        %518 = vmatpush.bf16.msra.mxu0 0
        %519 = vmatpush.bf16.msra.mxu0 0
        %520 = vmatpush.bf16.msra.mxu0 0
        %521 = vmatpush.bf16.msra.mxu0 %v509
        %522 = vmatmul.bf16.gmra.mxu0 %v506
        %v523 = vpop.f32.mrf.mxu0
        %v524 = vadd.f32 0.0, %v523
        %v525 = vpop.f32.mrf.mxu0
        %526 = vdwg.mxu0
        %527 = vmatpush.bf16.msra.mxu0 0
        %528 = vmatpush.bf16.msra.mxu0 0
        %529 = vmatpush.bf16.msra.mxu0 0
        %530 = vmatpush.bf16.msra.mxu0 0
        %531 = vmatpush.bf16.msra.mxu0 0
        %532 = vmatpush.bf16.msra.mxu0 0
        %533 = vmatpush.bf16.msra.mxu0 0
        %534 = vmatpush.bf16.msra.mxu0 %v512
        %535 = vmatmul.bf16.gmra.mxu0 %v506
        %v536 = vpop.f32.mrf.mxu0
        %v537 = vadd.f32 0.0, %v536
        %v538 = vpop.f32.mrf.mxu0
        %539 = vdwg.mxu0
        %v540 = vadd.f32 %v483, %v524
        %v541 = vadd.f32 %v484, %v537
        %v542 = vld [vmem:[#allocation2] sm:$0x3f]
        %s543 = scalar_lea.vmem %s2, 20
        %v544 = vld [vmem:[%s543] sm:$0xf]
        %546 = vst [vmem:[#allocation1] ss:$4 sm:$0xff] %v542
        %v547 = vld.sshfl [vmem:[#allocation1] sm:$0xff pattern:$0x73625140]
        %v549 = vld.sshfl [vmem:[#allocation1 + $0x8] sm:$0xff pattern:$0x73625140]
        %v551 = vld.sshfl [vmem:[#allocation1 + $0x10] sm:$0xff pattern:$0x73625140]
        %553 = vrot.lane.b32.xlu0 %v547, 88
        %v554 = vpop.permute.xlu0 %553
        %555 = vrot.lane.b32.xlu0 %v549, 88
        %v556 = vpop.permute.xlu0 %555
        %557 = vrot.lane.b32.xlu0 %v551, 88
        %v558 = vpop.permute.xlu0 %557
        %vm559 = vcmask 719872
        %v560 = vsel %vm559, %v554, %v556
        %v561 = vsel %vm559, %v556, %v558
        %v563 = vsel %vm297, %v544, 0
        %v566 = vsel %vm301, %v560, 0
        %v569 = vsel %vm301, %v561, 0
        %571 = vmatpush.bf16.msra.mxu0 0
        %572 = vmatpush.bf16.msra.mxu0 0
        %573 = vmatpush.bf16.msra.mxu0 0
        %574 = vmatpush.bf16.msra.mxu0 0
        %575 = vmatpush.bf16.msra.mxu0 0
        %576 = vmatpush.bf16.msra.mxu0 0
        %577 = vmatpush.bf16.msra.mxu0 0
        %578 = vmatpush.bf16.msra.mxu0 %v566
        %579 = vmatmul.bf16.gmra.mxu0 %v563
        %v580 = vpop.f32.mrf.mxu0
        %v581 = vadd.f32 0.0, %v580
        %v582 = vpop.f32.mrf.mxu0
        %583 = vdwg.mxu0
        %584 = vmatpush.bf16.msra.mxu0 0
        %585 = vmatpush.bf16.msra.mxu0 0
        %586 = vmatpush.bf16.msra.mxu0 0
        %587 = vmatpush.bf16.msra.mxu0 0
        %588 = vmatpush.bf16.msra.mxu0 0
        %589 = vmatpush.bf16.msra.mxu0 0
        %590 = vmatpush.bf16.msra.mxu0 0
        %591 = vmatpush.bf16.msra.mxu0 %v569
        %592 = vmatmul.bf16.gmra.mxu0 %v563
        %v593 = vpop.f32.mrf.mxu0
        %v594 = vadd.f32 0.0, %v593
        %v595 = vpop.f32.mrf.mxu0
        %596 = vdwg.mxu0
        %v597 = vadd.f32 %v540, %v581
        %v598 = vadd.f32 %v541, %v594
        %v599 = vld [vmem:[#allocation2] sm:$0x3f]
        %s600 = scalar_lea.vmem %s2, 24
        %v601 = vld [vmem:[%s600] sm:$0xf]
        %603 = vst [vmem:[#allocation1] ss:$4 sm:$0xff] %v599
        %v604 = vld.sshfl [vmem:[#allocation1] sm:$0xff pattern:$0x73625140]
        %v606 = vld.sshfl [vmem:[#allocation1 + $0x8] sm:$0xff pattern:$0x73625140]
        %v608 = vld.sshfl [vmem:[#allocation1 + $0x10] sm:$0xff pattern:$0x73625140]
        %610 = vrot.lane.b32.xlu0 %v604, 56
        %v611 = vpop.permute.xlu0 %610
        %612 = vrot.lane.b32.xlu0 %v606, 56
        %v613 = vpop.permute.xlu0 %612
        %614 = vrot.lane.b32.xlu0 %v608, 56
        %v615 = vpop.permute.xlu0 %614
        %vm616 = vcmask 457728
        %v617 = vsel %vm616, %v611, %v613
        %v618 = vsel %vm616, %v613, %v615
        %v620 = vsel %vm297, %v601, 0
        %v623 = vsel %vm301, %v617, 0
        %v626 = vsel %vm301, %v618, 0
        %628 = vmatpush.bf16.msra.mxu0 0
        %629 = vmatpush.bf16.msra.mxu0 0
        %630 = vmatpush.bf16.msra.mxu0 0
        %631 = vmatpush.bf16.msra.mxu0 0
        %632 = vmatpush.bf16.msra.mxu0 0
        %633 = vmatpush.bf16.msra.mxu0 0
        %634 = vmatpush.bf16.msra.mxu0 0
        %635 = vmatpush.bf16.msra.mxu0 %v623
        %636 = vmatmul.bf16.gmra.mxu0 %v620
        %v637 = vpop.f32.mrf.mxu0
        %v638 = vadd.f32 0.0, %v637
        %v639 = vpop.f32.mrf.mxu0
        %640 = vdwg.mxu0
        %641 = vmatpush.bf16.msra.mxu0 0
        %642 = vmatpush.bf16.msra.mxu0 0
        %643 = vmatpush.bf16.msra.mxu0 0
        %644 = vmatpush.bf16.msra.mxu0 0
        %645 = vmatpush.bf16.msra.mxu0 0
        %646 = vmatpush.bf16.msra.mxu0 0
        %647 = vmatpush.bf16.msra.mxu0 0
        %648 = vmatpush.bf16.msra.mxu0 %v626
        %649 = vmatmul.bf16.gmra.mxu0 %v620
        %v650 = vpop.f32.mrf.mxu0
        %v651 = vadd.f32 0.0, %v650
        %v652 = vpop.f32.mrf.mxu0
        %653 = vdwg.mxu0
        %v654 = vadd.f32 %v597, %v638
        %v655 = vadd.f32 %v598, %v651
        %v656 = vld [vmem:[#allocation2] sm:$0x3f]
        %s657 = scalar_lea.vmem %s2, 28
        %v658 = vld [vmem:[%s657] sm:$0xf]
        %660 = vst [vmem:[#allocation1] ss:$4 sm:$0xff] %v656
        %v661 = vld.sshfl [vmem:[#allocation1] sm:$0xff pattern:$0x73625140]
        %v663 = vld.sshfl [vmem:[#allocation1 + $0x8] sm:$0xff pattern:$0x73625140]
        %v665 = vld.sshfl [vmem:[#allocation1 + $0x10] sm:$0xff pattern:$0x73625140]
        %667 = vrot.lane.b32.xlu0 %v661, 54
        %v668 = vpop.permute.xlu0 %667
        %669 = vrot.lane.b32.xlu0 %v663, 54
        %v670 = vpop.permute.xlu0 %669
        %671 = vrot.lane.b32.xlu0 %v665, 54
        %v672 = vpop.permute.xlu0 %671
        %vm673 = vcmask 441344
        %v674 = vsel %vm673, %v668, %v670
        %v675 = vsel %vm673, %v670, %v672
        %v677 = vsel %vm297, %v658, 0
        %v680 = vsel %vm301, %v674, 0
        %v683 = vsel %vm301, %v675, 0
        %685 = vmatpush.bf16.msra.mxu0 0
        %686 = vmatpush.bf16.msra.mxu0 0
        %687 = vmatpush.bf16.msra.mxu0 0
        %688 = vmatpush.bf16.msra.mxu0 0
        %689 = vmatpush.bf16.msra.mxu0 0
        %690 = vmatpush.bf16.msra.mxu0 0
        %691 = vmatpush.bf16.msra.mxu0 0
        %692 = vmatpush.bf16.msra.mxu0 %v680
        %693 = vmatmul.bf16.gmra.mxu0 %v677
        %v694 = vpop.f32.mrf.mxu0
        %v695 = vadd.f32 0.0, %v694
        %v696 = vpop.f32.mrf.mxu0
        %697 = vdwg.mxu0
        %698 = vmatpush.bf16.msra.mxu0 0
        %699 = vmatpush.bf16.msra.mxu0 0
        %700 = vmatpush.bf16.msra.mxu0 0
        %701 = vmatpush.bf16.msra.mxu0 0
        %702 = vmatpush.bf16.msra.mxu0 0
        %703 = vmatpush.bf16.msra.mxu0 0
        %704 = vmatpush.bf16.msra.mxu0 0
        %705 = vmatpush.bf16.msra.mxu0 %v683
        %706 = vmatmul.bf16.gmra.mxu0 %v677
        %v707 = vpop.f32.mrf.mxu0
        %v708 = vadd.f32 0.0, %v707
        %v709 = vpop.f32.mrf.mxu0
        %710 = vdwg.mxu0
        %v711 = vadd.f32 %v654, %v695
        %v712 = vadd.f32 %v655, %v708
        %v713 = vld [vmem:[#allocation2] sm:$0x3f]
        %s714 = scalar_lea.vmem %s2, 32
        %v715 = vld [vmem:[%s714] sm:$0xf]
        %717 = vst [vmem:[#allocation1] ss:$4 sm:$0xff] %v713
        %v718 = vld.sshfl [vmem:[#allocation1] sm:$0xff pattern:$0x73625140]
        %v720 = vld.sshfl [vmem:[#allocation1 + $0x8] sm:$0xff pattern:$0x73625140]
        %v722 = vld.sshfl [vmem:[#allocation1 + $0x10] sm:$0xff pattern:$0x73625140]
        %724 = vrot.lane.b32.xlu0 %v718, 52
        %v725 = vpop.permute.xlu0 %724
        %726 = vrot.lane.b32.xlu0 %v720, 52
        %v727 = vpop.permute.xlu0 %726
        %728 = vrot.lane.b32.xlu0 %v722, 52
        %v729 = vpop.permute.xlu0 %728
        %vm730 = vcmask 424960
        %v731 = vsel %vm730, %v725, %v727
        %v732 = vsel %vm730, %v727, %v729
        %v734 = vsel %vm297, %v715, 0
        %v737 = vsel %vm301, %v731, 0
        %v740 = vsel %vm301, %v732, 0
        %742 = vmatpush.bf16.msra.mxu0 0
        %743 = vmatpush.bf16.msra.mxu0 0
        %744 = vmatpush.bf16.msra.mxu0 0
        %745 = vmatpush.bf16.msra.mxu0 0
        %746 = vmatpush.bf16.msra.mxu0 0
        %747 = vmatpush.bf16.msra.mxu0 0
        %748 = vmatpush.bf16.msra.mxu0 0
        %749 = vmatpush.bf16.msra.mxu0 %v737
        %750 = vmatmul.bf16.gmra.mxu0 %v734
        %v751 = vpop.f32.mrf.mxu0
        %v752 = vadd.f32 0.0, %v751
        %v753 = vpop.f32.mrf.mxu0
        %754 = vdwg.mxu0
        %755 = vmatpush.bf16.msra.mxu0 0
        %756 = vmatpush.bf16.msra.mxu0 0
        %757 = vmatpush.bf16.msra.mxu0 0
        %758 = vmatpush.bf16.msra.mxu0 0
        %759 = vmatpush.bf16.msra.mxu0 0
        %760 = vmatpush.bf16.msra.mxu0 0
        %761 = vmatpush.bf16.msra.mxu0 0
        %762 = vmatpush.bf16.msra.mxu0 %v740
        %763 = vmatmul.bf16.gmra.mxu0 %v734
        %v764 = vpop.f32.mrf.mxu0
        %v765 = vadd.f32 0.0, %v764
        %v766 = vpop.f32.mrf.mxu0
        %767 = vdwg.mxu0
        %v768 = vadd.f32 %v711, %v752
        %v769 = vadd.f32 %v712, %v765
        %v770 = vld [vmem:[%s3] sm:$0xff]
        %772 = vset.pattern.permute.xlu0 0
        %773 = vperm.xlu0 %772, %v770
        %v774 = vpop.permute.xlu0 %773
        %v776 = vadd.f32 %v768, %v774
        %v777 = vadd.f32 %v769, %v774
        %v778 = vmax.f32 %v776, 0.0
        %v779 = vmax.f32 %v777, 0.0
        %780 = vst [vmem:[%s246] sm:$0xff] %v778
        %781 = vst [vmem:[%s246 + $0x8] sm:$0xff] %v779
        %s782 = sand.u32 %s140, 1
        %s783 = scalar_lea.sflag [#allocation4], %s782
        %s784 = sand.u32 %s140, 1
        %s785 = smul.addr %s784, 16
        %s786 = scalar_lea.vmem [#allocation3], %s785
        // Predicated region
        $region37: #{tpu_custom_call.1} parent=35 // pred_check
          %p787 = pneg %p150
        $region38: #{tpu_custom_call.1} parent=35 // pred_check_branch
          %789 = sbr.rel (%p787) target = $region40
        $region39: #{tpu_custom_call.1} parent=35 // pred_region
          %s790 = smul.u32 2, %s23
          %792 = vsyncadd %s783, 0
          %s793 = smul.addr %s22, 2
          %s794 = sadd.s32 %s790, %s793
          %s795 = smul.addr %s794, 8
          %s796 = scalar_lea.hbm %s4, %s795
          %s798 = sshll.u32 %s786, 4
          %s799 = int_to_ptr.vmem [resolvable:$true] %s798
          %s800 = sshll.u32 %s796, 4
          %s801 = int_to_ptr.hbm [resolvable:$true] %s800
          %803 = dma.vmem_to_hbm [thread:$0]  %s799, 256, %s801, %s783
        $region40: #{tpu_custom_call.1} parent=35 // pred_fallthru
          _
      $region36: #{tpu_custom_call.1} parent=5 // pred_fallthru
        _
      %p804 = scmp.le.s32.totalorder 2, %s13
      // Predicated region
      $region41: #{tpu_custom_call.1} parent=5 // pred_check
        %p805 = pneg %p804
      $region42: #{tpu_custom_call.1} parent=5 // pred_check_branch
        %807 = sbr.rel (%p805) target = $region44
      $region43: #{tpu_custom_call.1} parent=5 // pred_region
        %s808 = ssub.s32 %s13, 2
        // Predicated region
        $region45: #{tpu_custom_call.1} parent=43 // pred_check
          %p809 = pneg %p156
        $region46: #{tpu_custom_call.1} parent=43 // pred_check_branch
          %811 = sbr.rel (%p809) target = $region48
        $region47: #{tpu_custom_call.1} parent=43 // pred_region
          %s812 = sand.u32 %s141, 1
          %s813 = scalar_lea.sflag [#allocation4], %s812
          %s814 = sand.u32 %s141, 1
          %s815 = smul.addr %s814, 16
          %s816 = scalar_lea.vmem [#allocation3], %s815
          %818 = dma.done %s813, 256
        $region48: #{tpu_custom_call.1} parent=43 // pred_fallthru
          _
      $region44: #{tpu_custom_call.1} parent=5 // pred_fallthru
        _
    $region6: #{tpu_custom_call.1} parent=1 // loop_footer
      %s17 = sadd.s32 1, %s13
    $region7: #{tpu_custom_call.1} parent=1 // loop_footer_branch
      %12 = sbr.rel target = $region3
    $region8: #{tpu_custom_call.1} parent=1 // loop_exit
      _
    %819 = vsyncpa [#allocation4], 1
    %s820 = scalar_lea.sflag [#allocation4], 1
    %821 = vsyncpa %s820, 1

</llo_original>
